<compile_context>
chip_gen: v7x
topology: tpu7x:2x2x1
jax: 0.10.0
libtpu: 0.0.40
codegen_flags: <defaults>
</compile_context>

<pallas_src>
import functools

import jax
import jax.numpy as jnp
from jax.experimental import pallas as pl
from jax.experimental.pallas import tpu as pltpu


def _window_max_kernel(x_ref, o_ref, *, window: int):
    """Sliding-window max (stride 1) along the sublane (middle) axis of the block."""
    x = x_ref[...]                       # (tb, W, tl)  -- W on sublanes, tl on lanes
    w_out = o_ref.shape[1]
    if w_out == 1:
        # Full-window max: single cross-sublane reduce, lane-dense store.
        o_ref[...] = jnp.max(x, axis=1, keepdims=True)
    else:
        # Pairwise tree (ceil(log2(window)) rounds) of full-vreg maxima; short
        # dependency chain keeps the VALU off the critical path (v5e concern),
        # and everything hides under the HBM-bound DMA anyway.
        vals = [x[:, k:k + w_out, :] for k in range(window)]
        while len(vals) > 1:
            nxt = [jnp.maximum(vals[i], vals[i + 1]) for i in range(0, len(vals) - 1, 2)]
            if len(vals) % 2:
                nxt.append(vals[-1])
            vals = nxt
        o_ref[...] = vals[0]


def _lane_tile(L: int, max_lanes: int = 4096) -> int:
    """Largest lane tile that is a multiple of 128, divides L and is <= max_lanes
    (falls back to the full L when L is not 128-aligned or already small)."""
    if L <= max_lanes or L % 128 != 0:
        return L
    t = max_lanes - (max_lanes % 128)
    while t >= 128:
        if L % t == 0:
            return t
        t -= 128
    return 128


def pillar_grid_fusion(x: jax.Array, fusion_channels: int) -> jax.Array:
    """Pallas implementation of PillarGridFusion.forward.

    Args:
      x: (N, C, D, H, W) array (torch MaxPool3d NCDHW convention).
      fusion_channels: window size along the last axis.
    Returns:
      (N, C, D, H) if the pooled axis collapses to size 1, else
      (N, C, D, H, W - fusion_channels + 1)  (matching torch.squeeze(., 4)).
    """
    N, C, D, H, W = x.shape
    assert W >= fusion_channels, "pool window larger than last dim"
    w_out = W - fusion_channels + 1

    B = N * C          # independent slabs (batch axis of the kernel grid)
    L = D * H          # lane axis (dense, typically >= 128)

    # Layout plumbing (pure data movement, no extra compute): put the pooled
    # axis W on sublanes and D*H on lanes.
    # NOTE: running in bf16 would halve HBM traffic; we keep the caller's dtype.
    x_flat = jnp.transpose(x, (0, 1, 4, 2, 3)).reshape(B, W, L)

    tl = _lane_tile(L)
    itemsize = x.dtype.itemsize
    # ~1 MiB of useful input per block (review: 0.5-2 MiB), double-buffered
    # in+out stays < ~4 MiB VMEM -> safe on v5e/v6e (128 MiB) and v7x (64 MiB).
    row_bytes = W * tl * itemsize
    tb = max(1, (1 << 20) // row_bytes)
    tb = min(tb, B)
    # Keep >= 2 grid steps when possible so v7x's two TensorCores both get work.
    if B > 1 and (L // tl) == 1:
        tb = min(tb, -(-B // 2))
    grid = (pl.cdiv(B, tb), L // tl)     # partial last batch block is masked by Pallas

    kernel = functools.partial(_window_max_kernel, window=fusion_channels)

    out_flat = pl.pallas_call(
        kernel,
        out_shape=jax.ShapeDtypeStruct((B, w_out, L), x.dtype),
        grid_spec=pltpu.PrefetchScalarGridSpec(
            num_scalar_prefetch=0,
            grid=grid,
            in_specs=[pl.BlockSpec((tb, W, tl), lambda i, j: (i, 0, j))],
            out_specs=pl.BlockSpec((tb, w_out, tl), lambda i, j: (i, 0, j)),
        ),
        compiler_params=pltpu.CompilerParams(
            dimension_semantics=("parallel", "parallel"),
        ),
    )(x_flat)

    if w_out == 1:
        # torch.squeeze(x, 4): (B, 1, D*H) is already (N, C, D, H) in memory order.
        return out_flat.reshape(N, C, D, H)
    out = out_flat.reshape(N, C, w_out, D, H)
    return jnp.transpose(out, (0, 1, 3, 4, 2))   # (N, C, D, H, w_out)


if __name__ == "__main__":
    key = jax.random.PRNGKey(0)
    N, C, D, H = 2, 4, 16, 16
    fusion_channels = 8

    # Typical PointPillars usage: W == fusion_channels -> pooled axis collapses
    # and is squeezed.
    W = fusion_channels
    x = jax.random.normal(key, (N, C, D, H, W), dtype=jnp.float32)

    out = jax.block_until_ready(pillar_grid_fusion(x, fusion_channels))
    ref = jnp.max(x, axis=-1)
    assert out.shape == (N, C, D, H), out.shape
    assert jnp.allclose(out, ref), "mismatch vs reference"

    # Also exercise the w_out > 1 (no squeeze) path.
    W2 = 12
    w_out2 = W2 - fusion_channels + 1
    x2 = jax.random.normal(key, (N, C, D, H, W2), dtype=jnp.float32)
    out2 = jax.block_until_ready(pillar_grid_fusion(x2, fusion_channels))
    ref2 = jnp.max(
        jnp.stack([x2[..., k:k + w_out2] for k in range(fusion_channels)], 0), 0)
    assert out2.shape == (N, C, D, H, w_out2), out2.shape
    assert jnp.allclose(out2, ref2), "mismatch vs reference (w_out>1)"

    print("KERNEL_OK")
</pallas_src>

<mosaic_0001>
module attributes {stable_mosaic.version = 11 : i64} {
  func.func @_window_max_kernel(%arg0: i32, %arg1: i32, %arg2: memref<4x8x256xf32, #tpu.memory_space<vmem>>, %arg3: memref<4x1x256xf32, #tpu.memory_space<vmem>>) attributes {dimension_semantics = [#tpu.dimension_semantics<parallel>, #tpu.dimension_semantics<parallel>], iteration_bounds = array<i64: 2, 1>, scalar_prefetch = 0 : i64, scratch_operands = 0 : i64, tpu.core_type = #tpu.core_type<tc>, window_params = [{transform_indices = @transform_0, window_bounds = array<i64: 4, 8, 256>}, {transform_indices = @transform_1, window_bounds = array<i64: 4, 1, 256>}]} {
    %c0 = arith.constant 0 : index
    %c0_0 = arith.constant 0 : index
    %c0_1 = arith.constant 0 : index
    %0 = vector.load %arg2[%c0, %c0_0, %c0_1] : memref<4x8x256xf32, #tpu.memory_space<vmem>>, vector<4x8x256xf32>
    %cst = arith.constant dense<0xFF800000> : vector<4x256xf32>
    %1 = vector.multi_reduction <maximumf>, %0, %cst [1] : vector<4x8x256xf32> to vector<4x256xf32>
    %2 = vector.shape_cast %1 : vector<4x256xf32> to vector<4x1x256xf32>
    %c0_2 = arith.constant 0 : index
    %c0_3 = arith.constant 0 : index
    %c0_4 = arith.constant 0 : index
    %3 = vector.load %arg3[%c0_2, %c0_3, %c0_4] : memref<4x1x256xf32, #tpu.memory_space<vmem>>, vector<4x1x256xf32>
    tpu.vector_store %arg3[%c0_2, %c0_3, %c0_4], %2 {strides = array<i32>} : memref<4x1x256xf32, #tpu.memory_space<vmem>>, vector<4x1x256xf32>,
    return
  }
  func.func @transform_0(%arg0: i32, %arg1: i32) -> (i32, i32, i32) {
    %c0_i32 = arith.constant 0 : i32
    %c0_i32_0 = arith.constant 0 : i32
    return %arg0, %c0_i32, %arg1 : i32, i32, i32
  }
  func.func @transform_1(%arg0: i32, %arg1: i32) -> (i32, i32, i32) {
    %c0_i32 = arith.constant 0 : i32
    %c0_i32_0 = arith.constant 0 : i32
    return %arg0, %c0_i32, %arg1 : i32, i32, i32
  }
}

</mosaic_0001>

<llo_original>
// kernel: tpu_custom_call.1
$region0: #{tpu_custom_call.1}
  #allocation0 [shape = 'u32[]', space=smem, size = 0x4, offset = 0x4, fixed_abs, tag = 'smem constant byte address 0x4 - core index']
  #allocation1 [shape = 'u32[144,128]{1,0:T(1,128)}', space=vmem, size = 0x12000, scoped, tag = 'internal scratch']
  %s0 = inlined_call_operand.hbm [shape: f32[8,8,256], index: 0, kind: input, shape index: {}]
  %s1 = inlined_call_operand.hbm [shape: f32[8,1,256], index: 1, kind: output, shape index: {}]
  %s2 = sld [smem:[#allocation0]]
  $region41: #{tpu_custom_call.1} parent=0
    _
  %s4 = ssub.s32 1, %s2
  %s5 = scalar_select 0, %s4, %s2
  $region1: #{tpu_custom_call.1} parent=0
    #allocation2 [shape = 'u8[65536]{0}', space=vmem, size = 0x10000, scoped, tag = 'input window, operand 0']
    #allocation3 [shape = 's32[2]{0}', space=sflag, size = 0x8, scoped, tag = 'scoped memory for tpu_custom_call.1']
    #allocation4 [shape = 's32[2]{0}', space=sflag, size = 0x8, scoped, tag = 'scoped memory for tpu_custom_call.1']
    #allocation5 [shape = 'u8[8192]{0}', space=vmem, size = 0x2000, scoped, tag = 'output window, operand 0']
    %6 = vsyncpa [#allocation3], 0
    %s7 = scalar_lea.sflag [#allocation3], 1
    %8 = vsyncpa %s7, 0
    %9 = vsyncpa [#allocation4], 0
    %s10 = scalar_lea.sflag [#allocation4], 1
    %11 = vsyncpa %s10, 0
    loop: start=0, step=1, limit=4
    $region2: #{tpu_custom_call.1} parent=1 // loop_pre_header
      _
    $region3: #{tpu_custom_call.1} parent=1 // loop_header
      %s13 = sphi 0, %s17
      %p14 = scmp.ge.s32.totalorder %s13, 4
      %s20 = sphi 0, %s32
      %s21 = sphi 0, %s28
      %s22 = sphi 0, %s20
      %s23 = sphi 0, %s21
      %s24 = sphi 0, %s22
      %s25 = sphi 0, %s23
      %s37 = sphi 0, %s39
      %s40 = sphi 0, %s37
      %s41 = sphi 0, %s40
      %s57 = sphi 0, %s41
      %s65 = sphi 0, %s67
      %s68 = sphi 0, %s65
      %s69 = sphi 0, %s68
      %s85 = sphi 0, %s69
    $region4: #{tpu_custom_call.1} parent=1 // loop_header_branch
      %16 = sbr.rel (%p14) target = $region8
    $region5: #{tpu_custom_call.1} parent=1 // loop_body
      %s18 = ssub.s32 %s13, 1
      %s19 = ssub.s32 %s13, 2
      %s26 = sadd.s32 1, %s21
      %p27 = scmp.ge.s32.totalorder %s26, 1
      %s28 = scalar_select %p27, 0, %s26
      %s29 = sadd.s32 1, %s20
      %s30 = scalar_select %p27, %s29, %s20
      %p31 = scmp.ge.s32.totalorder %s30, 2
      %s32 = scalar_select %p31, 0, %s30
      %s33 = ssub.s32 %s20, %s32
      %s34 = ssub.s32 %s21, %s28
      %s35 = sor.u32 %s33, %s34
      %p36 = scmp.eq.s32.totalorder %s35, 0
      %s38 = sadd.s32 %s37, 1
      %s39 = scalar_select %p36, %s37, %s38
      %p42 = pneg %p36
      %p43 = scmp.eq.s32.totalorder %s13, 1
      %p44 = por %p42, %p43
      %p45 = scmp.ne.s32.totalorder %s37, %s40
      %p46 = scmp.eq.s32.totalorder %s13, 0
      %p47 = por %p45, %p46
      %p48 = scmp.ne.s32.totalorder %s37, %s40
      %p49 = scmp.eq.s32.totalorder %s18, 1
      %p50 = por %p48, %p49
      %p51 = scmp.ne.s32.totalorder %s40, %s41
      %p52 = scmp.eq.s32.totalorder %s18, 0
      %p53 = por %p51, %p52
      %p54 = scmp.ne.s32.totalorder %s40, %s41
      %p55 = scmp.eq.s32.totalorder %s19, 1
      %p56 = por %p54, %p55
      %p58 = scmp.ne.s32.totalorder %s41, %s57
      %p59 = scmp.eq.s32.totalorder %s19, 0
      %p60 = por %p58, %p59
      %s61 = ssub.s32 %s20, %s32
      %s62 = ssub.s32 %s21, %s28
      %s63 = sor.u32 %s61, %s62
      %p64 = scmp.eq.s32.totalorder %s63, 0
      %s66 = sadd.s32 %s65, 1
      %s67 = scalar_select %p64, %s65, %s66
      %p70 = pneg %p64
      %p71 = scmp.eq.s32.totalorder %s13, 1
      %p72 = por %p70, %p71
      %p73 = scmp.ne.s32.totalorder %s65, %s68
      %p74 = scmp.eq.s32.totalorder %s13, 0
      %p75 = por %p73, %p74
      %p76 = scmp.ne.s32.totalorder %s65, %s68
      %p77 = scmp.eq.s32.totalorder %s18, 1
      %p78 = por %p76, %p77
      %p79 = scmp.ne.s32.totalorder %s68, %s69
      %p80 = scmp.eq.s32.totalorder %s18, 0
      %p81 = por %p79, %p80
      %p82 = scmp.ne.s32.totalorder %s68, %s69
      %p83 = scmp.eq.s32.totalorder %s19, 1
      %p84 = por %p82, %p83
      %p86 = scmp.ne.s32.totalorder %s69, %s85
      %p87 = scmp.eq.s32.totalorder %s19, 0
      %p88 = por %p86, %p87
      %p89 = scmp.le.s32.totalorder 1, %s13
      %p90 = scmp.lt.s32.totalorder %s13, 3
      %p91 = pnand %p89, %p90
      %p92 = pneg %p91
      // Predicated region
      $region9: #{tpu_custom_call.1} parent=5 // pred_check
        _
      $region10: #{tpu_custom_call.1} parent=5 // pred_check_branch
        %94 = sbr.rel (%p91) target = $region12
      $region11: #{tpu_custom_call.1} parent=5 // pred_region
        %s95 = ssub.s32 %s13, 1
      $region12: #{tpu_custom_call.1} parent=5 // pred_fallthru
        _
      %p96 = scmp.lt.s32.totalorder %s13, 2
      // Predicated region
      $region13: #{tpu_custom_call.1} parent=5 // pred_check
        %p97 = pneg %p96
      $region14: #{tpu_custom_call.1} parent=5 // pred_check_branch
        %99 = sbr.rel (%p97) target = $region16
      $region15: #{tpu_custom_call.1} parent=5 // pred_region
        // Predicated region
        $region17: #{tpu_custom_call.1} parent=15 // pred_check
          %p100 = pneg %p47
        $region18: #{tpu_custom_call.1} parent=15 // pred_check_branch
          %102 = sbr.rel (%p100) target = $region20
        $region19: #{tpu_custom_call.1} parent=15 // pred_region
          %s103 = sand.u32 %s37, 1
          %s104 = scalar_lea.sflag [#allocation3], %s103
          %s105 = sand.u32 %s37, 1
          %s106 = smul.addr %s105, 64
          %s107 = scalar_lea.vmem [#allocation2], %s106
          %s108 = smul.u32 4, %s20
          %s109 = smul.u32 2, %s21
          %s111 = ssub.s32 1024, 1024
          %112 = vsyncadd %s104, %s111
          %s113 = smul.addr %s108, 2
          %s114 = sadd.s32 %s109, %s113
          %s115 = smul.addr %s114, 128
          %s116 = scalar_lea.hbm %s0, %s115
          %s117 = sshll.u32 %s107, 4
          %s118 = int_to_ptr.vmem [resolvable:$true] %s117
          %123 = dma.hbm_to_vmem [thread:$0]  %s116, 1024, %s118, %s104, 256, 256, 16
        $region20: #{tpu_custom_call.1} parent=15 // pred_fallthru
          _
      $region16: #{tpu_custom_call.1} parent=5 // pred_fallthru
        _
      %p124 = scmp.le.s32.totalorder 1, %s13
      %p125 = scmp.lt.s32.totalorder %s13, 3
      %p126 = pnand %p124, %p125
      %p127 = pneg %p126
      // Predicated region
      $region21: #{tpu_custom_call.1} parent=5 // pred_check
        _
      $region22: #{tpu_custom_call.1} parent=5 // pred_check_branch
        %129 = sbr.rel (%p126) target = $region24
      $region23: #{tpu_custom_call.1} parent=5 // pred_region
        %s130 = ssub.s32 %s13, 1
        %s131 = sand.u32 %s40, 1
        %s132 = scalar_lea.sflag [#allocation3], %s131
        %s133 = sand.u32 %s40, 1
        %s134 = smul.addr %s133, 64
        %s135 = scalar_lea.vmem [#allocation2], %s134
        // Predicated region
        $region25: #{tpu_custom_call.1} parent=23 // pred_check
          %p136 = pneg %p53
        $region26: #{tpu_custom_call.1} parent=23 // pred_check_branch
          %138 = sbr.rel (%p136) target = $region28
        $region27: #{tpu_custom_call.1} parent=23 // pred_region
          %139 = dma.done %s132, 1024
        $region28: #{tpu_custom_call.1} parent=23 // pred_fallthru
          _
        %s140 = sand.u32 %s40, 1
        %s141 = scalar_lea.sflag [#allocation3], %s140
        %s142 = sand.u32 %s40, 1
        %s143 = smul.addr %s142, 64
        %s144 = scalar_lea.vmem [#allocation2], %s143
        %p145 = pneg %p53
        %p146 = pneg %p50
        %p147 = pneg %p81
        %p148 = pneg %p78
        %s149 = sand.u32 %s68, 1
        %s150 = scalar_lea.sflag [#allocation4], %s149
        %s151 = sand.u32 %s68, 1
        %s152 = smul.addr %s151, 8
        %s153 = scalar_lea.vmem [#allocation5], %s152
        %s154 = smul.u32 4, %s22
        %s155 = smul.u32 2, %s23
        %s156 = smul.u32 4, %s22
        %s157 = smul.u32 2, %s23
        %v158 = vld [vmem:[%s135] sm:$0xff]
        %v159 = vld [vmem:[%s135 + $0x8] sm:$0xff]
        %v160 = vld [vmem:[%s135 + $0x10] sm:$0xff]
        %v161 = vld [vmem:[%s135 + $0x18] sm:$0xff]
        %v162 = vld [vmem:[%s135 + $0x20] sm:$0xff]
        %v163 = vld [vmem:[%s135 + $0x28] sm:$0xff]
        %v164 = vld [vmem:[%s135 + $0x30] sm:$0xff]
        %v165 = vld [vmem:[%s135 + $0x38] sm:$0xff]
        %v166 = vrot.slane %v158, 4
        %v167 = vmax.f32 %v158, %v166
        %v168 = vrot.slane %v167, 2
        %v169 = vmax.f32 %v167, %v168
        %v170 = vrot.slane %v169, 1
        %v171 = vmax.f32 %v169, %v170
        %v172 = vrot.slane %v159, 4
        %v173 = vmax.f32 %v159, %v172
        %v174 = vrot.slane %v173, 2
        %v175 = vmax.f32 %v173, %v174
        %v176 = vrot.slane %v175, 1
        %v177 = vmax.f32 %v175, %v176
        %v178 = vrot.slane %v160, 4
        %v179 = vmax.f32 %v160, %v178
        %v180 = vrot.slane %v179, 2
        %v181 = vmax.f32 %v179, %v180
        %v182 = vrot.slane %v181, 1
        %v183 = vmax.f32 %v181, %v182
        %v184 = vrot.slane %v161, 4
        %v185 = vmax.f32 %v161, %v184
        %v186 = vrot.slane %v185, 2
        %v187 = vmax.f32 %v185, %v186
        %v188 = vrot.slane %v187, 1
        %v189 = vmax.f32 %v187, %v188
        %v190 = vrot.slane %v162, 4
        %v191 = vmax.f32 %v162, %v190
        %v192 = vrot.slane %v191, 2
        %v193 = vmax.f32 %v191, %v192
        %v194 = vrot.slane %v193, 1
        %v195 = vmax.f32 %v193, %v194
        %v196 = vrot.slane %v163, 4
        %v197 = vmax.f32 %v163, %v196
        %v198 = vrot.slane %v197, 2
        %v199 = vmax.f32 %v197, %v198
        %v200 = vrot.slane %v199, 1
        %v201 = vmax.f32 %v199, %v200
        %v202 = vrot.slane %v164, 4
        %v203 = vmax.f32 %v164, %v202
        %v204 = vrot.slane %v203, 2
        %v205 = vmax.f32 %v203, %v204
        %v206 = vrot.slane %v205, 1
        %v207 = vmax.f32 %v205, %v206
        %v208 = vrot.slane %v165, 4
        %v209 = vmax.f32 %v165, %v208
        %v210 = vrot.slane %v209, 2
        %v211 = vmax.f32 %v209, %v210
        %v212 = vrot.slane %v211, 1
        %v213 = vmax.f32 %v211, %v212
        %v222 = vcombine.low %v171, %v177
        %v224 = vunpack.c.l.s4 1966171168
        %v225 = vunpack.c.0.s8 %v224
        %v226 = vlaneseq
        %v227 = vshrl.u32 %v226, 7
        %v228 = vsub.s32 %v225, %v227
        %v229 = vrot.slane %v222, %v228
        %v231 = vunpack.c.l.s4 1966171168
        %v232 = vunpack.c.0.s8 %v231
        %v233 = vlaneseq
        %v234 = vshrl.u32 %v233, 7
        %v235 = vsub.s32 %v232, %v234
        %v236 = vrot.slane %v229, %v235
        %v237 = vcombine.low %v183, %v189
        %v239 = vunpack.c.l.s4 1966171168
        %v240 = vunpack.c.0.s8 %v239
        %v241 = vlaneseq
        %v242 = vshrl.u32 %v241, 7
        %v243 = vsub.s32 %v240, %v242
        %v244 = vrot.slane %v237, %v243
        %v246 = vunpack.c.l.s4 1966171168
        %v247 = vunpack.c.0.s8 %v246
        %v248 = vlaneseq
        %v249 = vshrl.u32 %v248, 7
        %v250 = vsub.s32 %v247, %v249
        %v251 = vrot.slane %v244, %v250
        %v252 = vcombine.low %v195, %v201
        %v254 = vunpack.c.l.s4 1966171168
        %v255 = vunpack.c.0.s8 %v254
        %v256 = vlaneseq
        %v257 = vshrl.u32 %v256, 7
        %v258 = vsub.s32 %v255, %v257
        %v259 = vrot.slane %v252, %v258
        %v261 = vunpack.c.l.s4 1966171168
        %v262 = vunpack.c.0.s8 %v261
        %v263 = vlaneseq
        %v264 = vshrl.u32 %v263, 7
        %v265 = vsub.s32 %v262, %v264
        %v266 = vrot.slane %v259, %v265
        %v267 = vcombine.low %v207, %v213
        %v269 = vunpack.c.l.s4 1966171168
        %v270 = vunpack.c.0.s8 %v269
        %v271 = vlaneseq
        %v272 = vshrl.u32 %v271, 7
        %v273 = vsub.s32 %v270, %v272
        %v274 = vrot.slane %v267, %v273
        %v276 = vunpack.c.l.s4 1966171168
        %v277 = vunpack.c.0.s8 %v276
        %v278 = vlaneseq
        %v279 = vshrl.u32 %v278, 7
        %v280 = vsub.s32 %v277, %v279
        %v281 = vrot.slane %v274, %v280
        %v286 = vlaneseq
        %vm287 = vcmp.ge.s32.totalorder %v286, 0
        %vm288 = vcmp.lt.s32.totalorder %v286, 256
        %vm289 = vmand %vm287, %vm288
        %290 = vst.msk [vmem:[%s153] sm:$0x3] %vm289, %v236
        %291 = vst.msk [vmem:[%s153 + $0x2] sm:$0x3] %vm289, %v251
        %292 = vst.msk [vmem:[%s153 + $0x4] sm:$0x3] %vm289, %v266
        %293 = vst.msk [vmem:[%s153 + $0x6] sm:$0x3] %vm289, %v281
        %s294 = sand.u32 %s68, 1
        %s295 = scalar_lea.sflag [#allocation4], %s294
        %s296 = sand.u32 %s68, 1
        %s297 = smul.addr %s296, 8
        %s298 = scalar_lea.vmem [#allocation5], %s297
        // Predicated region
        $region29: #{tpu_custom_call.1} parent=23 // pred_check
          %p299 = pneg %p78
        $region30: #{tpu_custom_call.1} parent=23 // pred_check_branch
          %301 = sbr.rel (%p299) target = $region32
        $region31: #{tpu_custom_call.1} parent=23 // pred_region
          %s302 = smul.u32 4, %s22
          %s303 = smul.u32 2, %s23
          %s305 = ssub.s32 128, 128
          %306 = vsyncadd %s295, %s305
          %s307 = smul.addr %s302, 2
          %s308 = sadd.s32 %s303, %s307
          %s309 = smul.addr %s308, 16
          %s310 = scalar_lea.hbm %s1, %s309
          %s311 = sshll.u32 %s298, 4
          %s312 = int_to_ptr.vmem [resolvable:$true] %s311
          %317 = dma.vmem_to_hbm [thread:$0]  %s312, 128, %s310, %s295, 32, 32, 2
        $region32: #{tpu_custom_call.1} parent=23 // pred_fallthru
          _
      $region24: #{tpu_custom_call.1} parent=5 // pred_fallthru
        _
      %p318 = scmp.le.s32.totalorder 2, %s13
      // Predicated region
      $region33: #{tpu_custom_call.1} parent=5 // pred_check
        %p319 = pneg %p318
      $region34: #{tpu_custom_call.1} parent=5 // pred_check_branch
        %321 = sbr.rel (%p319) target = $region36
      $region35: #{tpu_custom_call.1} parent=5 // pred_region
        %s322 = ssub.s32 %s13, 2
        // Predicated region
        $region37: #{tpu_custom_call.1} parent=35 // pred_check
          %p323 = pneg %p84
        $region38: #{tpu_custom_call.1} parent=35 // pred_check_branch
          %325 = sbr.rel (%p323) target = $region40
        $region39: #{tpu_custom_call.1} parent=35 // pred_region
          %s326 = sand.u32 %s69, 1
          %s327 = scalar_lea.sflag [#allocation4], %s326
          %s328 = sand.u32 %s69, 1
          %s329 = smul.addr %s328, 8
          %s330 = scalar_lea.vmem [#allocation5], %s329
          %331 = dma.done %s327, 128
        $region40: #{tpu_custom_call.1} parent=35 // pred_fallthru
          _
      $region36: #{tpu_custom_call.1} parent=5 // pred_fallthru
        _
    $region6: #{tpu_custom_call.1} parent=1 // loop_footer
      %s17 = sadd.s32 1, %s13
    $region7: #{tpu_custom_call.1} parent=1 // loop_footer_branch
      %12 = sbr.rel target = $region3
    $region8: #{tpu_custom_call.1} parent=1 // loop_exit
      _
    %332 = vsyncpa [#allocation3], 1
    %s333 = scalar_lea.sflag [#allocation3], 1
    %334 = vsyncpa %s333, 1
    %335 = vsyncpa [#allocation4], 1
    %s336 = scalar_lea.sflag [#allocation4], 1
    %337 = vsyncpa %s336, 1

</llo_original>
